<compile_context>
chip_gen: v7x
topology: tpu7x:2x2x1
jax: 0.10.0
libtpu: 0.0.40
codegen_flags: <defaults>
</compile_context>

<pallas_src>
import math

import jax
import jax.numpy as jnp
from jax import lax
from jax.experimental import pallas as pl
from jax.experimental.pallas import tpu as pltpu

LANE = 128        # lane width (last dim of every block)
CHUNK_ROWS = 32   # rows per inner-loop chunk (multiple of 32 -> ok for f32/bf16/int8 blocks)
UNROLL = 8        # inner fori_loop unroll factor


def _round_up(x: int, m: int) -> int:
    return ((x + m - 1) // m) * m


def _focal_terms(x, t, gamma):
    """Elementwise focal terms (f32 in, f32 out). Shared by kernel + tail path."""
    gamma = float(gamma)
    # Numerically-stable BCE with logits (matches torch.nn.BCEWithLogitsLoss):
    #   bce = max(x,0) - x*t + log1p(exp(-|x|))
    # Reuse s = exp(-|x|):  pt = exp(-bce) = exp(-m) / (1 + s)
    m = jnp.maximum(x, 0.0) - x * t
    s = jnp.exp(-jnp.abs(x))
    bce = m + jnp.log1p(s)
    pt = jnp.exp(-m) / (1.0 + s)
    omp = 1.0 - pt
    # (1 - pt) ** gamma: avoid jnp.power (exp+log on the EUP) for small int gamma.
    if gamma == 0.0:
        w = jnp.ones_like(omp)
    elif gamma.is_integer() and 1.0 <= gamma <= 4.0:
        w = omp
        for _ in range(int(gamma) - 1):
            w = w * omp
    else:
        w = jnp.power(omp, gamma)
    return w * bce


def _tpu_config():
    """(num_core_slices, max_tile_rows, vmem_limit_bytes) for the current chip."""
    kind = ""
    try:
        kind = jax.devices()[0].device_kind.lower()
    except Exception:
        pass
    try:
        vmem_cap = int(pltpu.get_tpu_info().vmem_capacity_bytes)
    except Exception:
        vmem_cap = 64 << 20  # conservative (v7x-sized)

    # v5e / v6e have a single TensorCore per chip; v7x (and v4/v5p megacore) have 2.
    single_tc = any(s in kind for s in ("v5e", "v5 lite", "v5lite",
                                        "v6e", "v6 lite", "v6lite", "lite"))
    num_cores = 1 if single_tc else 2

    if single_tc and "v5" in kind:
        # v5e: 820 GB/s HBM; 1 MiB f32 blocks already ~85% of roofline.
        max_tile_rows, vmem_limit = 2048, 32 << 20
    elif vmem_cap >= (100 << 20):
        # v6e-class (128 MiB VMEM): 4 MiB f32 blocks amortize per-step overhead.
        max_tile_rows, vmem_limit = 8192, 48 << 20
    else:
        # v7x-class (64 MiB VMEM per TC): bounded 2 MiB blocks, explicit budget.
        max_tile_rows, vmem_limit = 4096, 32 << 20
    return num_cores, max_tile_rows, vmem_limit


def _make_focal_kernel(gamma, rows, tile_rows, chunk_rows, tiles_per_core,
                       n_full_tiles, needs_mask):
    n_chunks = tile_rows // chunk_rows

    def focal_kernel(x_ref, t_ref, o_ref):
        c = pl.program_id(0)          # core slice ("parallel")
        i = pl.program_id(1)          # tile within the core slice ("arbitrary")

        @pl.when(i == 0)
        def _init():
            o_ref[...] = jnp.zeros_like(o_ref)

        gtile = c * tiles_per_core + i    # logical (un-clamped) global tile index

        def chunk_sum(r0, masked):
            # One (chunk_rows, LANE) chunk: load, compute, row-group reduce.
            x = x_ref[pl.ds(r0, chunk_rows), :].astype(jnp.float32)
            t = t_ref[pl.ds(r0, chunk_rows), :].astype(jnp.float32)
            f = _focal_terms(x, t, gamma)
            if masked:
                # Row-index mask (int32-safe) for OOB-padded / duplicate tiles.
                # Select (not multiply) so garbage lanes never propagate NaN/Inf.
                row = (gtile * tile_rows + r0
                       + lax.broadcasted_iota(jnp.int32, f.shape, 0))
                f = jnp.where(row < rows, f, 0.0)
            # Reduce along rows in vreg-sized groups: pure VPU adds into (8, LANE).
            return f.reshape(chunk_rows // 8, 8, LANE).sum(axis=0)

        def run(masked):
            if n_chunks == 1:
                acc = chunk_sum(0, masked)
            else:
                def body(j, acc):
                    r0 = pl.multiple_of(j * chunk_rows, chunk_rows)
                    return acc + chunk_sum(r0, masked)
                acc = lax.fori_loop(0, n_chunks, body,
                                    jnp.zeros((8, LANE), jnp.float32),
                                    unroll=min(UNROLL, n_chunks))
            o_ref[...] += acc

        if not needs_mask:
            run(False)
        elif n_full_tiles == 0:
            run(True)
        else:
            @pl.when(gtile < n_full_tiles)
            def _full():
                run(False)

            @pl.when(gtile >= n_full_tiles)
            def _partial():
                run(True)

    return focal_kernel


def focal_loss(inputs, targets, gamma: float = 2.0):
    """Pallas TPU implementation of FocalLoss.forward (reduction='mean').

    `inputs`/`targets` may be any float (or int/bool targets) dtype; they are
    streamed in their native dtype and cast to f32 inside the kernel.
    """
    assert inputs.shape == targets.shape
    n = int(math.prod(inputs.shape))
    assert n > 0

    x_flat = inputs.reshape(-1)
    t_flat = targets.reshape(-1)

    rows = n // LANE
    n_main = rows * LANE
    tail = n - n_main

    # Tail (< 128 elements): tiny wrapper-side computation, avoids padding the
    # full tensors just to make the last partial lane row.
    tail_sum = jnp.float32(0.0)
    if tail:
        xt = lax.slice(x_flat, (n_main,), (n,)).astype(jnp.float32)
        tt = lax.slice(t_flat, (n_main,), (n,)).astype(jnp.float32)
        tail_sum = jnp.sum(_focal_terms(xt, tt, gamma))

    if rows == 0:
        return tail_sum / jnp.float32(n)

    # Main slab: zero-copy bitcast reshape when n is a LANE multiple.
    if tail:
        x_main = lax.slice(x_flat, (0,), (n_main,))
        t_main = lax.slice(t_flat, (0,), (n_main,))
    else:
        x_main, t_main = x_flat, t_flat
    x2 = x_main.reshape(rows, LANE)
    t2 = t_main.reshape(rows, LANE)

    num_cores, max_tile_rows, vmem_limit = _tpu_config()

    # Chunk (inner loop) and tile (grid step) sizing.
    chunk_rows = min(CHUNK_ROWS, _round_up(rows, 32))
    tile_rows = min(max_tile_rows, _round_up(rows, chunk_rows))  # multiple of chunk_rows
    total_tiles = pl.cdiv(rows, tile_rows)
    num_cores = min(num_cores, total_tiles)      # never more core slices than tiles
    tiles_per_core = pl.cdiv(total_tiles, num_cores)
    n_full_tiles = rows // tile_rows             # tiles fully inside valid rows
    needs_mask = (num_cores * tiles_per_core * tile_rows) != rows

    kernel = _make_focal_kernel(gamma, rows, tile_rows, chunk_rows,
                                tiles_per_core, n_full_tiles, needs_mask)

    def in_idx(c, i):
        # Clamp so duplicate / fully-out-of-range tiles re-read the last valid
        # block; their contribution is masked to zero inside the kernel.
        return (jnp.minimum(c * tiles_per_core + i, total_tiles - 1), 0)

    partials = pl.pallas_call(
        kernel,
        out_shape=jax.ShapeDtypeStruct((num_cores * 8, LANE), jnp.float32),
        grid_spec=pltpu.PrefetchScalarGridSpec(
            num_scalar_prefetch=0,
            grid=(num_cores, tiles_per_core),
            in_specs=[
                pl.BlockSpec((tile_rows, LANE), in_idx),   # logits (native dtype)
                pl.BlockSpec((tile_rows, LANE), in_idx),   # targets (native dtype)
            ],
            # Resident accumulator block per core slice (same block for all i).
            out_specs=pl.BlockSpec((8, LANE), lambda c, i: (c, 0)),
        ),
        compiler_params=pltpu.CompilerParams(
            dimension_semantics=("parallel", "arbitrary"),
            vmem_limit_bytes=vmem_limit,
        ),
    )(x2, t2)

    # Single cross-lane/cross-core reduction + mean, once, outside the kernel.
    # TODO(synk): for n in the billions consider a pairwise/f64 final reduction.
    return (jnp.sum(partials) + tail_sum) / jnp.float32(n)


def focal_loss_ref(inputs, targets, gamma: float = 2.0):
    """Pure-JAX reference (mirrors the PyTorch module)."""
    x = inputs.astype(jnp.float32)
    t = targets.astype(jnp.float32)
    bce = jnp.maximum(x, 0.0) - x * t + jnp.log1p(jnp.exp(-jnp.abs(x)))
    pt = jnp.exp(-bce)
    return jnp.mean(jnp.power(1.0 - pt, gamma) * bce)


if __name__ == "__main__":
    key = jax.random.PRNGKey(0)
    k1, k2, k3, k4 = jax.random.split(key, 4)

    # NCHW-shaped example; 2*4*16*16 = 2048 elements (LANE multiple -> zero-copy path).
    shape = (2, 4, 16, 16)
    logits = jax.random.normal(k1, shape, dtype=jnp.float32) * 2.0
    targets = (jax.random.uniform(k2, shape) > 0.5).astype(jnp.float32)

    loss = jax.block_until_ready(focal_loss(logits, targets, gamma=2.0))
    ref = focal_loss_ref(logits, targets, gamma=2.0)
    assert jnp.allclose(loss, ref, rtol=2e-5, atol=1e-6), (loss, ref)

    # Narrow-dtype hard labels: identical result, ~1.3x less HBM traffic.
    loss_bf16 = jax.block_until_ready(
        focal_loss(logits, targets.astype(jnp.bfloat16), gamma=2.0))
    assert jnp.allclose(loss_bf16, ref, rtol=2e-5, atol=1e-6), (loss_bf16, ref)

    # Non-LANE-multiple size exercises the unpadded main slab + wrapper tail path.
    shape2 = (3, 5, 7, 11)   # 1155 elements
    logits2 = jax.random.normal(k3, shape2, dtype=jnp.float32) * 2.0
    targets2 = (jax.random.uniform(k4, shape2) > 0.5).astype(jnp.float32)
    loss2 = jax.block_until_ready(focal_loss(logits2, targets2, gamma=2.0))
    ref2 = focal_loss_ref(logits2, targets2, gamma=2.0)
    assert jnp.allclose(loss2, ref2, rtol=2e-5, atol=1e-6), (loss2, ref2)

    print("KERNEL_OK")
</pallas_src>

<mosaic_0001>
module attributes {stable_mosaic.version = 11 : i64} {
  func.func @focal_kernel(%arg0: i32, %arg1: i32, %arg2: memref<32x128xf32, #tpu.memory_space<vmem>>, %arg3: memref<32x128xf32, #tpu.memory_space<vmem>>, %arg4: memref<8x128xf32, #tpu.memory_space<vmem>>) attributes {dimension_semantics = [#tpu.dimension_semantics<parallel>, #tpu.dimension_semantics<arbitrary>], iteration_bounds = array<i64: 1, 1>, scalar_prefetch = 0 : i64, scratch_operands = 0 : i64, tpu.core_type = #tpu.core_type<tc>, window_params = [{transform_indices = @transform_0, window_bounds = array<i64: 32, 128>}, {transform_indices = @transform_1, window_bounds = array<i64: 32, 128>}, {transform_indices = @transform_2, window_bounds = array<i64: 8, 128>}]} {
    %c0_i32 = arith.constant 0 : i32
    %0 = arith.cmpi eq, %arg1, %c0_i32 : i32
    %1 = arith.extui %0 : i1 to i32
    %c0_i32_0 = arith.constant 0 : i32
    %2 = arith.cmpi ne, %1, %c0_i32_0 : i32
    scf.if %2 {
      %cst_15 = arith.constant 0.000000e+00 : f32
      %41 = vector.broadcast %cst_15 : f32 to vector<8x128xf32>
      %c0_16 = arith.constant 0 : index
      %c0_17 = arith.constant 0 : index
      %42 = vector.load %arg4[%c0_16, %c0_17] : memref<8x128xf32, #tpu.memory_space<vmem>>, vector<8x128xf32>
      tpu.vector_store %arg4[%c0_16, %c0_17], %41 {strides = array<i32>} : memref<8x128xf32, #tpu.memory_space<vmem>>, vector<8x128xf32>,
    } else {
    }
    %c1_i32 = arith.constant 1 : i32
    %3 = arith.muli %arg0, %c1_i32 : i32
    %4 = arith.addi %3, %arg1 : i32
    %c0 = arith.constant 0 : index
    %c0_1 = arith.constant 0 : index
    %5 = vector.load %arg2[%c0, %c0_1] : memref<32x128xf32, #tpu.memory_space<vmem>>, vector<32x128xf32>
    %c0_2 = arith.constant 0 : index
    %c0_3 = arith.constant 0 : index
    %6 = vector.load %arg3[%c0_2, %c0_3] : memref<32x128xf32, #tpu.memory_space<vmem>>, vector<32x128xf32>
    %cst = arith.constant 0.000000e+00 : f32
    %7 = vector.broadcast %cst : f32 to vector<32x128xf32>
    %8 = arith.maximumf %5, %7 : vector<32x128xf32>
    %9 = arith.mulf %5, %6 : vector<32x128xf32>
    %10 = arith.subf %8, %9 : vector<32x128xf32>
    %11 = math.absf %5 : vector<32x128xf32>
    %cst_4 = arith.constant 0.000000e+00 : f32
    %12 = vector.broadcast %cst_4 : f32 to vector<32x128xf32>
    %13 = arith.subf %12, %11 : vector<32x128xf32>
    %14 = math.exp %13 : vector<32x128xf32>
    %15 = math.log1p %14 : vector<32x128xf32>
    %16 = arith.addf %10, %15 : vector<32x128xf32>
    %cst_5 = arith.constant 0.000000e+00 : f32
    %17 = vector.broadcast %cst_5 : f32 to vector<32x128xf32>
    %18 = arith.subf %17, %10 : vector<32x128xf32>
    %19 = math.exp %18 : vector<32x128xf32>
    %cst_6 = arith.constant 1.000000e+00 : f32
    %20 = vector.broadcast %cst_6 : f32 to vector<32x128xf32>
    %21 = arith.addf %20, %14 : vector<32x128xf32>
    %22 = arith.divf %19, %21 : vector<32x128xf32>
    %cst_7 = arith.constant 1.000000e+00 : f32
    %23 = vector.broadcast %cst_7 : f32 to vector<32x128xf32>
    %24 = arith.subf %23, %22 : vector<32x128xf32>
    %25 = arith.mulf %24, %24 : vector<32x128xf32>
    %26 = arith.mulf %25, %16 : vector<32x128xf32>
    %c32_i32 = arith.constant 32 : i32
    %27 = arith.muli %4, %c32_i32 : i32
    %c0_i32_8 = arith.constant 0 : i32
    %28 = arith.addi %27, %c0_i32_8 : i32
    %29 = tpu.iota {dimensions = array<i32: 0>} : vector<32x128xi32>
    %30 = vector.broadcast %28 : i32 to vector<32x128xi32>
    %31 = arith.addi %30, %29 : vector<32x128xi32>
    %c16_i32 = arith.constant 16 : i32
    %32 = vector.broadcast %c16_i32 : i32 to vector<32x128xi32>
    %33 = arith.cmpi slt, %31, %32 : vector<32x128xi32>
    %cst_9 = arith.constant 0.000000e+00 : f32
    %34 = vector.broadcast %cst_9 : f32 to vector<32x128xf32>
    %35 = arith.select %33, %26, %34 : vector<32x128xi1>, vector<32x128xf32>
    %36 = vector.shape_cast %35 : vector<32x128xf32> to vector<4x8x128xf32>
    %cst_10 = arith.constant dense<0.000000e+00> : vector<8x128xf32>
    %37 = vector.multi_reduction <add>, %36, %cst_10 [0] : vector<4x8x128xf32> to vector<8x128xf32>
    %c0_11 = arith.constant 0 : index
    %c0_12 = arith.constant 0 : index
    %38 = vector.load %arg4[%c0_11, %c0_12] : memref<8x128xf32, #tpu.memory_space<vmem>>, vector<8x128xf32>
    %39 = arith.addf %38, %37 : vector<8x128xf32>
    %c0_13 = arith.constant 0 : index
    %c0_14 = arith.constant 0 : index
    %40 = vector.load %arg4[%c0_13, %c0_14] : memref<8x128xf32, #tpu.memory_space<vmem>>, vector<8x128xf32>
    tpu.vector_store %arg4[%c0_13, %c0_14], %39 {strides = array<i32>} : memref<8x128xf32, #tpu.memory_space<vmem>>, vector<8x128xf32>,
    return
  }
  func.func @transform_0(%arg0: i32, %arg1: i32) -> (i32, i32) {
    %c1_i32 = arith.constant 1 : i32
    %0 = arith.muli %arg0, %c1_i32 : i32
    %1 = arith.addi %0, %arg1 : i32
    %c0_i32 = arith.constant 0 : i32
    %2 = arith.minsi %1, %c0_i32 : i32
    %c0_i32_0 = arith.constant 0 : i32
    %c0_i32_1 = arith.constant 0 : i32
    return %2, %c0_i32_0 : i32, i32
  }
  func.func @transform_1(%arg0: i32, %arg1: i32) -> (i32, i32) {
    %c1_i32 = arith.constant 1 : i32
    %0 = arith.muli %arg0, %c1_i32 : i32
    %1 = arith.addi %0, %arg1 : i32
    %c0_i32 = arith.constant 0 : i32
    %2 = arith.minsi %1, %c0_i32 : i32
    %c0_i32_0 = arith.constant 0 : i32
    %c0_i32_1 = arith.constant 0 : i32
    return %2, %c0_i32_0 : i32, i32
  }
  func.func @transform_2(%arg0: i32, %arg1: i32) -> (i32, i32) {
    %c0_i32 = arith.constant 0 : i32
    %c0_i32_0 = arith.constant 0 : i32
    return %arg0, %c0_i32 : i32, i32
  }
}

</mosaic_0001>

<llo_original>
// kernel: tpu_custom_call.1
$region0: #{tpu_custom_call.1}
  #allocation0 [shape = 'u32[]', space=smem, size = 0x4, offset = 0x4, fixed_abs, tag = 'smem constant byte address 0x4 - core index']
  #allocation1 [shape = 'u32[144,128]{1,0:T(1,128)}', space=vmem, size = 0x12000, scoped, tag = 'internal scratch']
  %s0 = inlined_call_operand.hbm [shape: f32[16,128], index: 0, kind: input, shape index: {}]
  %s1 = inlined_call_operand.hbm [shape: f32[16,128], index: 1, kind: input, shape index: {}]
  %s2 = inlined_call_operand.hbm [shape: f32[8,128], index: 2, kind: output, shape index: {}]
  %s3 = sld [smem:[#allocation0]]
  $region30: #{tpu_custom_call.1} parent=0
    _
  %s5 = ssub.s32 1, %s3
  %s6 = scalar_select 0, %s5, %s3
  $region1: #{tpu_custom_call.1} parent=0
    #allocation2 [shape = 'u8[16384]{0}', space=vmem, size = 0x4000, scoped, tag = 'input window, operand 0, single buffered']
    #allocation3 [shape = 's32[1]{0}', space=sflag, size = 0x4, scoped, tag = 'scoped memory for tpu_custom_call.1']
    #allocation4 [shape = 's32[1]{0}', space=sflag, size = 0x4, scoped, tag = 'scoped memory for tpu_custom_call.1']
    #allocation5 [shape = 'u8[16384]{0}', space=vmem, size = 0x4000, scoped, tag = 'input window, operand 1, single buffered']
    #allocation6 [shape = 's32[1]{0}', space=sflag, size = 0x4, scoped, tag = 'scoped memory for tpu_custom_call.1']
    #allocation7 [shape = 'u8[4096]{0}', space=vmem, size = 0x1000, scoped, tag = 'output window, operand 0, single buffered']
    %7 = vsyncpa [#allocation3], 0
    %8 = vsyncpa [#allocation6], 0
    %9 = vsyncpa [#allocation4], 0
    // Predicated region
    $region2: #{tpu_custom_call.1} parent=1 // pred_check
      _
    $region3: #{tpu_custom_call.1} parent=1 // pred_check_branch
      %11 = sbr.rel (0) target = $region5
    $region4: #{tpu_custom_call.1} parent=1 // pred_region
      %s12 = sadd.s32 0, 0
      %p13 = scmp.lt.s32.totalorder %s12, 0
      %s14 = scalar_select %p13, %s12, 0
      %s15 = smul.u32 4, %s14
      %s16 = ssub.s32 2, %s15
      %s17 = smul.u32 128, %s16
      %s19 = ssub.s32 512, %s17
      %20 = vsyncadd [#allocation3], %s19
      %p21 = scmp.ne.s32.totalorder 0, %s17
      %s22 = smul.addr %s15, 128
      %s23 = scalar_lea.hbm %s0, %s22
      %s24 = smul.u32 8, %s16
      %s25 = sshll.u32 [#allocation2], 4
      %s26 = int_to_ptr.vmem [resolvable:$true] %s25
      %s27 = sshll.u32 %s24, 4
      %31 = dma.hbm_to_vmem [thread:$0]  (%p21), %s23, %s27, %s26, [#allocation3], 128, 128, 8
    $region5: #{tpu_custom_call.1} parent=1 // pred_fallthru
      _
    // Predicated region
    $region6: #{tpu_custom_call.1} parent=1 // pred_check
      _
    $region7: #{tpu_custom_call.1} parent=1 // pred_check_branch
      %33 = sbr.rel (0) target = $region9
    $region8: #{tpu_custom_call.1} parent=1 // pred_region
      %s34 = sadd.s32 0, 0
      %p35 = scmp.lt.s32.totalorder %s34, 0
      %s36 = scalar_select %p35, %s34, 0
      %s37 = smul.u32 4, %s36
      %s38 = ssub.s32 2, %s37
      %s39 = smul.u32 128, %s38
      %s41 = ssub.s32 512, %s39
      %42 = vsyncadd [#allocation6], %s41
      %p43 = scmp.ne.s32.totalorder 0, %s39
      %s44 = smul.addr %s37, 128
      %s45 = scalar_lea.hbm %s1, %s44
      %s46 = smul.u32 8, %s38
      %s47 = sshll.u32 [#allocation5], 4
      %s48 = int_to_ptr.vmem [resolvable:$true] %s47
      %s49 = sshll.u32 %s46, 4
      %53 = dma.hbm_to_vmem [thread:$0]  (%p43), %s45, %s49, %s48, [#allocation6], 128, 128, 8
    $region9: #{tpu_custom_call.1} parent=1 // pred_fallthru
      _
    // Predicated region
    $region10: #{tpu_custom_call.1} parent=1 // pred_check
      _
    $region11: #{tpu_custom_call.1} parent=1 // pred_check_branch
      %55 = sbr.rel (0) target = $region13
    $region12: #{tpu_custom_call.1} parent=1 // pred_region
      %56 = dma.done [#allocation3], 512
    $region13: #{tpu_custom_call.1} parent=1 // pred_fallthru
      _
    // Predicated region
    $region14: #{tpu_custom_call.1} parent=1 // pred_check
      _
    $region15: #{tpu_custom_call.1} parent=1 // pred_check_branch
      %58 = sbr.rel (0) target = $region17
    $region16: #{tpu_custom_call.1} parent=1 // pred_region
      %59 = dma.done [#allocation6], 512
    $region17: #{tpu_custom_call.1} parent=1 // pred_fallthru
      _
    %s60 = sadd.s32 0, 0
    %p61 = scmp.lt.s32.totalorder %s60, 0
    %s62 = scalar_select %p61, %s60, 0
    %s63 = smul.u32 4, %s62
    %s64 = ssub.s32 2, %s63
    %s65 = smul.u32 128, %s64
    %s66 = sadd.s32 0, 0
    %p67 = scmp.lt.s32.totalorder %s66, 0
    %s68 = scalar_select %p67, %s66, 0
    %s69 = smul.u32 4, %s68
    %s70 = ssub.s32 2, %s69
    %s71 = smul.u32 128, %s70
    %p72 = scmp.eq.s32.totalorder 0, 0
    // Predicated region
    $region18: #{tpu_custom_call.1} parent=1 // pred_check
      %p73 = pneg %p72
    $region19: #{tpu_custom_call.1} parent=1 // pred_check_branch
      %75 = sbr.rel (%p73) target = $region21
    $region20: #{tpu_custom_call.1} parent=1 // pred_region
      %76 = vst [vmem:[#allocation7] sm:$0xff] 0.0
    $region21: #{tpu_custom_call.1} parent=1 // pred_fallthru
      _
    %s77 = sadd.s32 0, 0
    %v78 = vld [vmem:[#allocation2] sm:$0xff]
    %v79 = vld [vmem:[#allocation2 + $0x8] sm:$0xff]
    %v80 = vld [vmem:[#allocation2 + $0x10] sm:$0xff]
    %v81 = vld [vmem:[#allocation2 + $0x18] sm:$0xff]
    %v82 = vld [vmem:[#allocation5] sm:$0xff]
    %v83 = vld [vmem:[#allocation5 + $0x8] sm:$0xff]
    %v84 = vld [vmem:[#allocation5 + $0x10] sm:$0xff]
    %v85 = vld [vmem:[#allocation5 + $0x18] sm:$0xff]
    %v86 = vmax.f32 %v78, 0.0
    %v87 = vmax.f32 %v79, 0.0
    %v88 = vmax.f32 %v80, 0.0
    %v89 = vmax.f32 %v81, 0.0
    %v90 = vmul.f32 %v78, %v82
    %v91 = vmul.f32 %v79, %v83
    %v92 = vmul.f32 %v80, %v84
    %v93 = vmul.f32 %v81, %v85
    %v94 = vsub.f32 %v86, %v90
    %v95 = vsub.f32 %v87, %v91
    %v96 = vsub.f32 %v88, %v92
    %v97 = vsub.f32 %v89, %v93
    %v98 = vand.u32 2147483647, %v78
    %v99 = vand.u32 2147483647, %v79
    %v100 = vand.u32 2147483647, %v80
    %v101 = vand.u32 2147483647, %v81
    %v102 = vsub.f32 0.0, %v98
    %v103 = vsub.f32 0.0, %v99
    %v104 = vsub.f32 0.0, %v100
    %v105 = vsub.f32 0.0, %v101
    %v106 = vmul.f32 %v102, 1.442695
    %v107 = vpow.pop %v106
    %v108 = vmul.f32 %v103, 1.442695
    %v109 = vpow.pop %v108
    %v110 = vmul.f32 %v104, 1.442695
    %v111 = vpow.pop %v110
    %v112 = vmul.f32 %v105, 1.442695
    %v113 = vpow.pop %v112
    %v114 = vadd.f32 %v107, 1.0
    %v115 = vlog2.pop %v114
    %v116 = vmul.f32 %v115, 0.6931472
    %v117 = vmul.f32 -0.5, %v107
    %v118 = vadd.f32 %v117, 1.0
    %v119 = vmul.f32 %v118, %v107
    %v120 = vand.u32 2147483647, %v107
    %vm121 = vcmp.lt.f32.partialorder %v120, 0.0004427343
    %v122 = vsel %vm121, %v119, %v116
    %v123 = vadd.f32 %v109, 1.0
    %v124 = vlog2.pop %v123
    %v125 = vmul.f32 %v124, 0.6931472
    %v126 = vmul.f32 -0.5, %v109
    %v127 = vadd.f32 %v126, 1.0
    %v128 = vmul.f32 %v127, %v109
    %v129 = vand.u32 2147483647, %v109
    %vm130 = vcmp.lt.f32.partialorder %v129, 0.0004427343
    %v131 = vsel %vm130, %v128, %v125
    %v132 = vadd.f32 %v111, 1.0
    %v133 = vlog2.pop %v132
    %v134 = vmul.f32 %v133, 0.6931472
    %v135 = vmul.f32 -0.5, %v111
    %v136 = vadd.f32 %v135, 1.0
    %v137 = vmul.f32 %v136, %v111
    %v138 = vand.u32 2147483647, %v111
    %vm139 = vcmp.lt.f32.partialorder %v138, 0.0004427343
    %v140 = vsel %vm139, %v137, %v134
    %v141 = vadd.f32 %v113, 1.0
    %v142 = vlog2.pop %v141
    %v143 = vmul.f32 %v142, 0.6931472
    %v144 = vmul.f32 -0.5, %v113
    %v145 = vadd.f32 %v144, 1.0
    %v146 = vmul.f32 %v145, %v113
    %v147 = vand.u32 2147483647, %v113
    %vm148 = vcmp.lt.f32.partialorder %v147, 0.0004427343
    %v149 = vsel %vm148, %v146, %v143
    %v150 = vadd.f32 %v94, %v122
    %v151 = vadd.f32 %v95, %v131
    %v152 = vadd.f32 %v96, %v140
    %v153 = vadd.f32 %v97, %v149
    %v154 = vsub.f32 0.0, %v94
    %v155 = vsub.f32 0.0, %v95
    %v156 = vsub.f32 0.0, %v96
    %v157 = vsub.f32 0.0, %v97
    %v158 = vmul.f32 %v154, 1.442695
    %v159 = vpow.pop %v158
    %v160 = vmul.f32 %v155, 1.442695
    %v161 = vpow.pop %v160
    %v162 = vmul.f32 %v156, 1.442695
    %v163 = vpow.pop %v162
    %v164 = vmul.f32 %v157, 1.442695
    %v165 = vpow.pop %v164
    %v166 = vadd.f32 %v107, 1.0
    %v167 = vadd.f32 %v109, 1.0
    %v168 = vadd.f32 %v111, 1.0
    %v169 = vadd.f32 %v113, 1.0
    %v170 = vrcp.pop %v166
    %v171 = vmul.f32 %v159, %v170
    %v172 = vrcp.pop %v167
    %v173 = vmul.f32 %v161, %v172
    %v174 = vrcp.pop %v168
    %v175 = vmul.f32 %v163, %v174
    %v176 = vrcp.pop %v169
    %v177 = vmul.f32 %v165, %v176
    %v178 = vsub.f32 1.0, %v171
    %v179 = vsub.f32 1.0, %v173
    %v180 = vsub.f32 1.0, %v175
    %v181 = vsub.f32 1.0, %v177
    %v182 = vmul.f32 %v178, %v178
    %v183 = vmul.f32 %v179, %v179
    %v184 = vmul.f32 %v180, %v180
    %v185 = vmul.f32 %v181, %v181
    %v186 = vmul.f32 %v182, %v150
    %v187 = vmul.f32 %v183, %v151
    %v188 = vmul.f32 %v184, %v152
    %v189 = vmul.f32 %v185, %v153
    %s190 = smul.u32 %s77, 32
    %v191 = vlaneseq
    %v192 = vshrl.u32 %v191, 7
    %v193 = vadd.s32 %v192, 8
    %v194 = vadd.s32 %v192, 16
    %v195 = vadd.s32 %v192, 24
    %v196 = vstv %s190
    %v197 = vadd.s32 %v196, %v192
    %v198 = vadd.s32 %v196, %v193
    %v199 = vadd.s32 %v196, %v194
    %v200 = vadd.s32 %v196, %v195
    %vm201 = vcmp.lt.s32.totalorder %v197, 16
    %vm202 = vcmp.lt.s32.totalorder %v198, 16
    %vm203 = vcmp.lt.s32.totalorder %v199, 16
    %vm204 = vcmp.lt.s32.totalorder %v200, 16
    %v205 = vsel %vm201, %v186, 0.0
    %v206 = vsel %vm202, %v187, 0.0
    %v207 = vsel %vm203, %v188, 0.0
    %v208 = vsel %vm204, %v189, 0.0
    %v209 = vadd.f32 %v205, %v206
    %v210 = vadd.f32 %v209, %v207
    %v211 = vadd.f32 %v210, %v208
    %v212 = vld [vmem:[#allocation7] sm:$0xff]
    %v213 = vadd.f32 %v212, %v211
    %214 = vst [vmem:[#allocation7] sm:$0xff] %v213
    // Predicated region
    $region22: #{tpu_custom_call.1} parent=1 // pred_check
      _
    $region23: #{tpu_custom_call.1} parent=1 // pred_check_branch
      %216 = sbr.rel (0) target = $region25
    $region24: #{tpu_custom_call.1} parent=1 // pred_region
      %s218 = ssub.s32 128, 128
      %219 = vsyncadd [#allocation4], %s218
      %s221 = sshll.u32 [#allocation7], 4
      %s222 = int_to_ptr.vmem [resolvable:$true] %s221
      %224 = dma.vmem_to_hbm [thread:$0]  %s222, 128, %s2, [#allocation4]
    $region25: #{tpu_custom_call.1} parent=1 // pred_fallthru
      _
    // Predicated region
    $region26: #{tpu_custom_call.1} parent=1 // pred_check
      _
    $region27: #{tpu_custom_call.1} parent=1 // pred_check_branch
      %226 = sbr.rel (0) target = $region29
    $region28: #{tpu_custom_call.1} parent=1 // pred_region
      %227 = dma.done [#allocation4], 128
    $region29: #{tpu_custom_call.1} parent=1 // pred_fallthru
      _
    %228 = vsyncpa [#allocation3], 1
    %229 = vsyncpa [#allocation6], 1
    %230 = vsyncpa [#allocation4], 1

</llo_original>
